<compile_context>
chip_gen: v6e
topology: v6e:2x2x1
jax: 0.10.0
libtpu: 0.0.40
codegen_flags: <defaults>
</compile_context>

<pallas_src>
import functools
import math

import numpy as np
import jax
import jax.numpy as jnp
from jax.experimental import pallas as pl
from jax.experimental.pallas import tpu as pltpu

BN_EPS = 1e-5


# ---------------------------------------------------------------------------
# Kernel A: folded-tap matmul (small C_in).  One MXU contraction per tile.
#   x_ref: (RB, Kp)          bf16  rows = flattened (n, t, v) output positions
#   w_ref: (Kp, C_out)       bf16  full folded weight, VMEM-resident (constant block)
#   b_ref: (1,  C_out)       f32   folded bias, VMEM-resident
#   o_ref: (RB, TCt)         bf16  lane-dense output tile
# ---------------------------------------------------------------------------
def _folded_matmul_kernel(x_ref, w_ref, b_ref, o_ref, *, tct):
    coff = pl.multiple_of(pl.program_id(1) * tct, tct)
    acc = jnp.dot(x_ref[...], w_ref[:, pl.ds(coff, tct)],
                  preferred_element_type=jnp.float32)
    o_ref[...] = (acc + b_ref[:, pl.ds(coff, tct)]).astype(o_ref.dtype)


# ---------------------------------------------------------------------------
# Kernel B: 9-tap temporal conv (large C_in), value-chained accumulation,
# single store (no RMW passes over the output block).
#   x_ref: ((T+8)*Vp, C_in)   bf16  per-sample, time-padded, rows ordered (t, v)
#   w_ref: (KT, C_in, C_out)  bf16  full folded weight, VMEM-resident
#   b_ref: (1, C_out)         f32
#   o_ref: (T*Vp, TCt)        bf16
# ---------------------------------------------------------------------------
def _tap_conv_kernel(x_ref, w_ref, b_ref, o_ref, *, vp, tct):
    kt = w_ref.shape[0]
    tv = o_ref.shape[0]
    coff = pl.multiple_of(pl.program_id(1) * tct, tct)
    # tap 0
    acc = jnp.dot(x_ref[pl.ds(0, tv), :], w_ref[0, :, pl.ds(coff, tct)],
                  preferred_element_type=jnp.float32)
    # taps 1..8: value chain (MXU result-path accumulation, drained once)
    for j in range(1, kt):
        acc = acc + jnp.dot(x_ref[pl.ds(j * vp, tv), :],
                            w_ref[j, :, pl.ds(coff, tct)],
                            preferred_element_type=jnp.float32)
    o_ref[...] = (acc + b_ref[:, pl.ds(coff, tct)]).astype(o_ref.dtype)


# ----------------------------- parameters ----------------------------------

def init_params(key, in_channels, out_channels, kernel_size=9, stride=1):
    assert stride == 1  # TODO(synk): stride > 1 temporal subsampling
    pad = (kernel_size - 1) // 2
    fan_out = out_channels * kernel_size * 1
    W = (jax.random.normal(key, (out_channels, in_channels, kernel_size, 1),
                           jnp.float32)
         * math.sqrt(2.0 / fan_out))                       # kaiming_normal fan_out
    b = jnp.zeros((out_channels,), jnp.float32)            # conv_init: bias = 0
    return dict(
        W=W, b=b, pad=pad, stride=stride,
        bn_gamma=jnp.ones((out_channels,), jnp.float32),   # bn_init(self.bn, 1)
        bn_beta=jnp.zeros((out_channels,), jnp.float32),
        bn_mean=jnp.zeros((out_channels,), jnp.float32),   # fresh running stats
        bn_var=jnp.ones((out_channels,), jnp.float32),
    )


# ----------------------------- helpers --------------------------------------

def _pick_ct_tile(c_out):
    if c_out % 256 == 0:      # full v6e/v7x MXU N-width
        return 256
    if c_out % 128 == 0:      # v5e MXU width / lane width
        return 128
    return c_out


def _pick_row_block(rows):
    for rb in (1024, 512, 256, 128, 64, 32, 16, 8):
        if rows % rb == 0:
            return rb
    return rows


# ----------------------------- forward (wrapper) ----------------------------

def unit_tcn_skip_forward(x, params, compute_dtype=jnp.bfloat16,
                          out_dtype=jnp.bfloat16, channels_last_out=False):
    N, C_in, T, V = x.shape
    W, b = params['W'], params['b']
    C_out, _, KT, _ = W.shape
    pad = params['pad']
    assert params['stride'] == 1  # TODO(synk): stride > 1 temporal subsampling

    # ---- fold eval-mode BN + conv bias into the weights (host-side, tiny) ----
    scale = params['bn_gamma'] / jnp.sqrt(params['bn_var'] + BN_EPS)         # (C_out,)
    shift = params['bn_beta'] - params['bn_mean'] * scale
    w_taps = jnp.transpose(W[:, :, :, 0] * scale[:, None, None], (2, 1, 0))  # (KT, C_in, C_out)
    bias = (b * scale + shift).reshape(1, C_out).astype(jnp.float32)

    TCt = _pick_ct_tile(C_out)
    n_ct = C_out // TCt
    out_isz = np.dtype(out_dtype).itemsize
    cparams = pltpu.CompilerParams(
        dimension_semantics=("parallel", "parallel"),
        vmem_limit_bytes=32 * 1024 * 1024)

    x_cl = jnp.transpose(x, (0, 2, 3, 1))                                    # (N, T, V, C_in)

    if C_in <= 64:
        # ------- path A: fold taps into the contraction (host im2col) -------
        x_pad = jnp.pad(x_cl, ((0, 0), (pad, pad), (0, 0), (0, 0)))          # (N, T+8, V, C_in)
        x_col = jnp.concatenate([x_pad[:, j:j + T] for j in range(KT)], axis=-1)
        K = KT * C_in
        R = N * T * V
        x2 = x_col.reshape(R, K).astype(compute_dtype)
        w2 = w_taps.reshape(K, C_out).astype(compute_dtype)
        Kp = ((K + 7) // 8) * 8                                              # sublane-align K
        if Kp != K:
            x2 = jnp.pad(x2, ((0, 0), (0, Kp - K)))
            w2 = jnp.pad(w2, ((0, Kp - K), (0, 0)))
        RB = _pick_row_block(R)
        cost = pl.CostEstimate(
            flops=2 * R * K * C_out, transcendentals=0,
            bytes_accessed=int(R * Kp * 2 + Kp * C_out * 2 + 4 * C_out
                               + R * C_out * out_isz))
        out2 = pl.pallas_call(
            functools.partial(_folded_matmul_kernel, tct=TCt),
            out_shape=jax.ShapeDtypeStruct((R, C_out), out_dtype),
            grid_spec=pltpu.PrefetchScalarGridSpec(
                num_scalar_prefetch=0,
                grid=(R // RB, n_ct),
                in_specs=[
                    pl.BlockSpec((RB, Kp), lambda r, c: (r, 0)),     # reused across c
                    pl.BlockSpec((Kp, C_out), lambda r, c: (0, 0)),  # VMEM-resident weight
                    pl.BlockSpec((1, C_out), lambda r, c: (0, 0)),   # VMEM-resident bias
                ],
                out_specs=pl.BlockSpec((RB, TCt), lambda r, c: (r, c)),
            ),
            compiler_params=cparams,
            cost_estimate=cost,
        )(x2, w2, bias)
        out_cl = out2.reshape(N, T, V, C_out)
    else:
        # ------- path B: 9 tap matmuls, value-chained accumulation ----------
        Vp = ((V + 7) // 8) * 8                          # sublane-aligned tap row slices
        x_pad = jnp.pad(x_cl, ((0, 0), (pad, pad), (0, Vp - V), (0, 0)))     # (N, T+8, Vp, C_in)
        Rp = (T + 2 * pad) * Vp
        TVp = T * Vp
        x2 = x_pad.reshape(N, Rp, C_in).astype(compute_dtype)
        w2 = w_taps.astype(compute_dtype)
        cost = pl.CostEstimate(
            flops=2 * N * TVp * KT * C_in * C_out, transcendentals=0,
            bytes_accessed=int(N * Rp * C_in * 2 + KT * C_in * C_out * 2 + 4 * C_out
                               + N * TVp * C_out * out_isz))
        out3 = pl.pallas_call(
            functools.partial(_tap_conv_kernel, vp=Vp, tct=TCt),
            out_shape=jax.ShapeDtypeStruct((N, TVp, C_out), out_dtype),
            grid_spec=pltpu.PrefetchScalarGridSpec(
                num_scalar_prefetch=0,
                grid=(N, n_ct),
                in_specs=[
                    pl.BlockSpec((None, Rp, C_in), lambda n, c: (n, 0, 0)),      # per-sample slab, reused across c
                    pl.BlockSpec((KT, C_in, C_out), lambda n, c: (0, 0, 0)),     # VMEM-resident weight
                    pl.BlockSpec((1, C_out), lambda n, c: (0, 0)),               # VMEM-resident bias
                ],
                out_specs=pl.BlockSpec((None, TVp, TCt), lambda n, c: (n, 0, c)),
            ),
            compiler_params=cparams,
            cost_estimate=cost,
        )(x2, w2, bias)
        out_cl = out3.reshape(N, T, Vp, C_out)[:, :, :V, :]

    if channels_last_out:
        return out_cl                                    # (N, T, V, C_out)
    # back to PyTorch NCHW = (N, C_out, T, V)
    return jnp.transpose(out_cl, (0, 3, 1, 2))


# ----------------------------- pure-JAX reference ---------------------------

def reference_forward(x, params):
    HI = jax.lax.Precision.HIGHEST
    conv = jax.lax.conv_general_dilated(
        x, params['W'], window_strides=(1, 1),
        padding=[(params['pad'], params['pad']), (0, 0)],
        dimension_numbers=('NCHW', 'OIHW', 'NCHW'), precision=HI)
    conv = conv + params['b'][None, :, None, None]
    scale = params['bn_gamma'] / jnp.sqrt(params['bn_var'] + BN_EPS)
    shift = params['bn_beta'] - params['bn_mean'] * scale
    return conv * scale[None, :, None, None] + shift[None, :, None, None]


# ----------------------------- main ------------------------------------------

if __name__ == "__main__":
    key = jax.random.PRNGKey(0)

    # ---- test 1: small C_in -> folded-contraction path (C_in=8, C_out=256) ----
    N, C_in, C_out, T, V = 2, 8, 256, 16, 16
    kx, kp, key = jax.random.split(key, 3)
    x = jax.random.normal(kx, (N, C_in, T, V), jnp.float32)
    params = init_params(kp, C_in, C_out, kernel_size=9, stride=1)
    out = jax.block_until_ready(unit_tcn_skip_forward(x, params))
    assert out.shape == (N, C_out, T, V)
    ref = reference_forward(x, params)
    np.testing.assert_allclose(np.asarray(jnp.asarray(out, jnp.float32)),
                               np.asarray(ref), rtol=2e-2, atol=2e-2)

    # ---- test 2: large C_in -> 9-tap path; V=25 exercises the V->Vp padding ----
    N, C_in, C_out, T, V = 2, 128, 128, 16, 25
    kx, kp, key = jax.random.split(key, 3)
    x = jax.random.normal(kx, (N, C_in, T, V), jnp.float32)
    params = init_params(kp, C_in, C_out, kernel_size=9, stride=1)
    out = jax.block_until_ready(unit_tcn_skip_forward(x, params))
    assert out.shape == (N, C_out, T, V)
    ref = reference_forward(x, params)
    np.testing.assert_allclose(np.asarray(jnp.asarray(out, jnp.float32)),
                               np.asarray(ref), rtol=2e-2, atol=2e-2)

    print("KERNEL_OK")
</pallas_src>

<mosaic_0001>
module attributes {stable_mosaic.version = 11 : i64} {
  func.func @_folded_matmul_kernel(%arg0: i32, %arg1: i32, %arg2: memref<512x72xbf16, #tpu.memory_space<vmem>>, %arg3: memref<72x256xbf16, #tpu.memory_space<vmem>>, %arg4: memref<1x256xf32, #tpu.memory_space<vmem>>, %arg5: memref<512x256xbf16, #tpu.memory_space<vmem>>) attributes {dimension_semantics = [#tpu.dimension_semantics<parallel>, #tpu.dimension_semantics<parallel>], iteration_bounds = array<i64: 1, 1>, scalar_prefetch = 0 : i64, scratch_operands = 0 : i64, tpu.core_type = #tpu.core_type<tc>, window_params = [{transform_indices = @transform_0, window_bounds = array<i64: 512, 72>}, {pipeline_mode = #tpu.pipeline_mode<synchronous>, transform_indices = @transform_1, window_bounds = array<i64: 72, 256>}, {pipeline_mode = #tpu.pipeline_mode<synchronous>, transform_indices = @transform_2, window_bounds = array<i64: 1, 256>}, {transform_indices = @transform_3, window_bounds = array<i64: 512, 256>}]} {
    %c256_i32 = arith.constant 256 : i32
    %0 = arith.muli %arg1, %c256_i32 : i32
    %1 = tpu.assume_multiple %0, 256 : i32
    %c0 = arith.constant 0 : index
    %c0_0 = arith.constant 0 : index
    %2 = vector.load %arg2[%c0, %c0_0] : memref<512x72xbf16, #tpu.memory_space<vmem>>, vector<512x72xbf16>
    %c0_1 = arith.constant 0 : index
    %3 = arith.index_cast %1 : i32 to index
    %4 = vector.load %arg3[%c0_1, %3] : memref<72x256xbf16, #tpu.memory_space<vmem>>, vector<72x256xbf16>
    %cst = arith.constant dense<0.000000e+00> : vector<512x256xf32>
    %5 = tpu.matmul %2, %4, %cst {dimension_numbers = #tpu.dot_dimension_numbers<[1], [0], [0], [1], [0, 0, 1, 1], [], []>} : vector<512x72xbf16>, vector<72x256xbf16>, vector<512x256xf32> -> vector<512x256xf32>
    %c0_2 = arith.constant 0 : index
    %6 = arith.index_cast %1 : i32 to index
    %7 = vector.load %arg4[%c0_2, %6] : memref<1x256xf32, #tpu.memory_space<vmem>>, vector<1x256xf32>
    %8 = vector.broadcast %7 : vector<1x256xf32> to vector<512x256xf32>
    %9 = arith.addf %5, %8 : vector<512x256xf32>
    %10 = arith.truncf %9 : vector<512x256xf32> to vector<512x256xbf16>
    %c0_3 = arith.constant 0 : index
    %c0_4 = arith.constant 0 : index
    %11 = vector.load %arg5[%c0_3, %c0_4] : memref<512x256xbf16, #tpu.memory_space<vmem>>, vector<512x256xbf16>
    tpu.vector_store %arg5[%c0_3, %c0_4], %10 {strides = array<i32>} : memref<512x256xbf16, #tpu.memory_space<vmem>>, vector<512x256xbf16>,
    return
  }
  func.func @transform_0(%arg0: i32, %arg1: i32) -> (i32, i32) {
    %c0_i32 = arith.constant 0 : i32
    %c0_i32_0 = arith.constant 0 : i32
    return %arg0, %c0_i32 : i32, i32
  }
  func.func @transform_1(%arg0: i32, %arg1: i32) -> (i32, i32) {
    %c0_i32 = arith.constant 0 : i32
    %c0_i32_0 = arith.constant 0 : i32
    %c0_i32_1 = arith.constant 0 : i32
    return %c0_i32, %c0_i32_0 : i32, i32
  }
  func.func @transform_2(%arg0: i32, %arg1: i32) -> (i32, i32) {
    %c0_i32 = arith.constant 0 : i32
    %c0_i32_0 = arith.constant 0 : i32
    %c0_i32_1 = arith.constant 0 : i32
    return %c0_i32, %c0_i32_0 : i32, i32
  }
  func.func @transform_3(%arg0: i32, %arg1: i32) -> (i32, i32) {
    %c0_i32 = arith.constant 0 : i32
    return %arg0, %arg1 : i32, i32
  }
}

</mosaic_0001>

<llo_original>
// kernel: tpu_custom_call.1
$region0: #{tpu_custom_call.1}
  #allocation0 [shape = 'u32[]', space=smem, size = 0x4, offset = 0x4, fixed_abs, tag = 'smem constant byte address 0x4 - core index']
  #allocation1 [shape = 'u32[144,128]{1,0:T(1,128)}', space=vmem, size = 0x12000, scoped, tag = 'internal scratch']
  %s0 = inlined_call_operand.vmem [shape: bf16[512,72], index: 0, kind: input, shape index: {}]
  %s1 = inlined_call_operand.vmem [shape: bf16[72,256], index: 1, kind: input, shape index: {}]
  %s2 = inlined_call_operand.vmem [shape: f32[1,256], index: 2, kind: input, shape index: {}]
  %s3 = inlined_call_operand.hbm [shape: bf16[512,256], index: 3, kind: output, shape index: {}]
  %s4 = sld [smem:[#allocation0]]
  $region22: #{tpu_custom_call.1} parent=0
    _
  %s6 = ssub.s32 1, %s4
  %s7 = scalar_select 0, %s6, %s4
  $region1: #{tpu_custom_call.1} parent=0
    #allocation2 [shape = 'u8[262144]{0}', space=vmem, size = 0x40000, scoped, tag = 'output window, operand 0, single buffered']
    #allocation3 [shape = 's32[1]{0}', space=sflag, size = 0x4, scoped, tag = 'scoped memory for tpu_custom_call.1']
    %8 = vsyncpa [#allocation3], 0
    // Predicated region
    $region2: #{tpu_custom_call.1} parent=1 // pred_check
      _
    $region3: #{tpu_custom_call.1} parent=1 // pred_check_branch
      %10 = sbr.rel (0) target = $region5
    $region4: #{tpu_custom_call.1} parent=1 // pred_region
      _
    $region5: #{tpu_custom_call.1} parent=1 // pred_fallthru
      _
    // Predicated region
    $region6: #{tpu_custom_call.1} parent=1 // pred_check
      _
    $region7: #{tpu_custom_call.1} parent=1 // pred_check_branch
      %12 = sbr.rel (0) target = $region9
    $region8: #{tpu_custom_call.1} parent=1 // pred_region
      _
    $region9: #{tpu_custom_call.1} parent=1 // pred_fallthru
      _
    // Predicated region
    $region10: #{tpu_custom_call.1} parent=1 // pred_check
      _
    $region11: #{tpu_custom_call.1} parent=1 // pred_check_branch
      %14 = sbr.rel (0) target = $region13
    $region12: #{tpu_custom_call.1} parent=1 // pred_region
      _
    $region13: #{tpu_custom_call.1} parent=1 // pred_fallthru
      _
    %s16 = smul.u32 0, 256
    %v17 = vld [vmem:[%s0] sm:$0xf]
    %v18 = vld [vmem:[%s0 + $0x4] sm:$0xf]
    %v19 = vld [vmem:[%s0 + $0x8] sm:$0xf]
    %v20 = vld [vmem:[%s0 + $0xc] sm:$0xf]
    %v21 = vld [vmem:[%s0 + $0x10] sm:$0xf]
    %v22 = vld [vmem:[%s0 + $0x14] sm:$0xf]
    %v23 = vld [vmem:[%s0 + $0x18] sm:$0xf]
    %v24 = vld [vmem:[%s0 + $0x1c] sm:$0xf]
    %v25 = vld [vmem:[%s0 + $0x20] sm:$0xf]
    %v26 = vld [vmem:[%s0 + $0x24] sm:$0xf]
    %v27 = vld [vmem:[%s0 + $0x28] sm:$0xf]
    %v28 = vld [vmem:[%s0 + $0x2c] sm:$0xf]
    %v29 = vld [vmem:[%s0 + $0x30] sm:$0xf]
    %v30 = vld [vmem:[%s0 + $0x34] sm:$0xf]
    %v31 = vld [vmem:[%s0 + $0x38] sm:$0xf]
    %v32 = vld [vmem:[%s0 + $0x3c] sm:$0xf]
    %v33 = vld [vmem:[%s0 + $0x40] sm:$0xf]
    %v34 = vld [vmem:[%s0 + $0x44] sm:$0xf]
    %v35 = vld [vmem:[%s0 + $0x48] sm:$0xf]
    %v36 = vld [vmem:[%s0 + $0x4c] sm:$0xf]
    %v37 = vld [vmem:[%s0 + $0x50] sm:$0xf]
    %v38 = vld [vmem:[%s0 + $0x54] sm:$0xf]
    %v39 = vld [vmem:[%s0 + $0x58] sm:$0xf]
    %v40 = vld [vmem:[%s0 + $0x5c] sm:$0xf]
    %v41 = vld [vmem:[%s0 + $0x60] sm:$0xf]
    %v42 = vld [vmem:[%s0 + $0x64] sm:$0xf]
    %v43 = vld [vmem:[%s0 + $0x68] sm:$0xf]
    %v44 = vld [vmem:[%s0 + $0x6c] sm:$0xf]
    %v45 = vld [vmem:[%s0 + $0x70] sm:$0xf]
    %v46 = vld [vmem:[%s0 + $0x74] sm:$0xf]
    %v47 = vld [vmem:[%s0 + $0x78] sm:$0xf]
    %v48 = vld [vmem:[%s0 + $0x7c] sm:$0xf]
    %v49 = vld [vmem:[%s0 + $0x80] sm:$0xf]
    %v50 = vld [vmem:[%s0 + $0x84] sm:$0xf]
    %v51 = vld [vmem:[%s0 + $0x88] sm:$0xf]
    %v52 = vld [vmem:[%s0 + $0x8c] sm:$0xf]
    %v53 = vld [vmem:[%s0 + $0x90] sm:$0xf]
    %v54 = vld [vmem:[%s0 + $0x94] sm:$0xf]
    %v55 = vld [vmem:[%s0 + $0x98] sm:$0xf]
    %v56 = vld [vmem:[%s0 + $0x9c] sm:$0xf]
    %v57 = vld [vmem:[%s0 + $0xa0] sm:$0xf]
    %v58 = vld [vmem:[%s0 + $0xa4] sm:$0xf]
    %v59 = vld [vmem:[%s0 + $0xa8] sm:$0xf]
    %v60 = vld [vmem:[%s0 + $0xac] sm:$0xf]
    %v61 = vld [vmem:[%s0 + $0xb0] sm:$0xf]
    %v62 = vld [vmem:[%s0 + $0xb4] sm:$0xf]
    %v63 = vld [vmem:[%s0 + $0xb8] sm:$0xf]
    %v64 = vld [vmem:[%s0 + $0xbc] sm:$0xf]
    %v65 = vld [vmem:[%s0 + $0xc0] sm:$0xf]
    %v66 = vld [vmem:[%s0 + $0xc4] sm:$0xf]
    %v67 = vld [vmem:[%s0 + $0xc8] sm:$0xf]
    %v68 = vld [vmem:[%s0 + $0xcc] sm:$0xf]
    %v69 = vld [vmem:[%s0 + $0xd0] sm:$0xf]
    %v70 = vld [vmem:[%s0 + $0xd4] sm:$0xf]
    %v71 = vld [vmem:[%s0 + $0xd8] sm:$0xf]
    %v72 = vld [vmem:[%s0 + $0xdc] sm:$0xf]
    %v73 = vld [vmem:[%s0 + $0xe0] sm:$0xf]
    %v74 = vld [vmem:[%s0 + $0xe4] sm:$0xf]
    %v75 = vld [vmem:[%s0 + $0xe8] sm:$0xf]
    %v76 = vld [vmem:[%s0 + $0xec] sm:$0xf]
    %v77 = vld [vmem:[%s0 + $0xf0] sm:$0xf]
    %v78 = vld [vmem:[%s0 + $0xf4] sm:$0xf]
    %v79 = vld [vmem:[%s0 + $0xf8] sm:$0xf]
    %v80 = vld [vmem:[%s0 + $0xfc] sm:$0xf]
    %s81 = sshra.s32 %s16, 7
    %s82 = sand.u32 %s16, 127
    %s83 = smul.addr %s81, 4
    %s84 = scalar_lea.vmem %s1, %s83
    %v85 = vld [vmem:[%s84] sm:$0xff]
    %v86 = vld [vmem:[%s84 + $0x8] sm:$0xff]
    %v87 = vld [vmem:[%s84 + $0x10] sm:$0xff]
    %v88 = vld [vmem:[%s84 + $0x18] sm:$0xff]
    %v89 = vld [vmem:[%s84 + $0x20] sm:$0xff]
    %v90 = vld [vmem:[%s84 + $0x28] sm:$0xff]
    %v91 = vld [vmem:[%s84 + $0x30] sm:$0xff]
    %v92 = vld [vmem:[%s84 + $0x38] sm:$0xff]
    %v93 = vld [vmem:[%s84 + $0x40] sm:$0xff]
    %s94 = scalar_lea.vmem %s2, %s81
    %v95 = vld [vmem:[%s94] sm:$0x3]
    %v97 = vlaneseq
    %v98 = vshrl.u32 %v97, 7
    %v99 = vsub.s32 0, %v98
    %v100 = vrot.slane %v95, %v99
    %v101 = vlaneseq
    %v102 = vshrl.u32 %v101, 7
    %v103 = vsub.s32 1, %v102
    %v104 = vrot.slane %v95, %v103
    %v171 = vunpack.c.l.b16 %v17
    %v172 = vunpack.c.l.b16 %v18
    %v173 = vunpack.c.l.b16 %v19
    %v174 = vunpack.c.l.b16 %v20
    %v175 = vunpack.c.l.b16 %v21
    %v176 = vunpack.c.l.b16 %v22
    %v177 = vunpack.c.l.b16 %v23
    %v178 = vunpack.c.l.b16 %v24
    %v179 = vunpack.c.l.b16 %v25
    %v180 = vunpack.c.l.b16 %v26
    %v181 = vunpack.c.l.b16 %v27
    %v182 = vunpack.c.l.b16 %v28
    %v183 = vunpack.c.l.b16 %v29
    %v184 = vunpack.c.l.b16 %v30
    %v185 = vunpack.c.l.b16 %v31
    %v186 = vunpack.c.l.b16 %v32
    %v187 = vunpack.c.l.b16 %v33
    %v188 = vunpack.c.l.b16 %v34
    %v189 = vunpack.c.l.b16 %v35
    %v190 = vunpack.c.l.b16 %v36
    %v191 = vunpack.c.l.b16 %v37
    %v192 = vunpack.c.l.b16 %v38
    %v193 = vunpack.c.l.b16 %v39
    %v194 = vunpack.c.l.b16 %v40
    %v195 = vunpack.c.l.b16 %v41
    %v196 = vunpack.c.l.b16 %v42
    %v197 = vunpack.c.l.b16 %v43
    %v198 = vunpack.c.l.b16 %v44
    %v199 = vunpack.c.l.b16 %v45
    %v200 = vunpack.c.l.b16 %v46
    %v201 = vunpack.c.l.b16 %v47
    %v202 = vunpack.c.l.b16 %v48
    %v203 = vunpack.c.l.b16 %v49
    %v204 = vunpack.c.l.b16 %v50
    %v205 = vunpack.c.l.b16 %v51
    %v206 = vunpack.c.l.b16 %v52
    %v207 = vunpack.c.l.b16 %v53
    %v208 = vunpack.c.l.b16 %v54
    %v209 = vunpack.c.l.b16 %v55
    %v210 = vunpack.c.l.b16 %v56
    %v211 = vunpack.c.l.b16 %v57
    %v212 = vunpack.c.l.b16 %v58
    %v213 = vunpack.c.l.b16 %v59
    %v214 = vunpack.c.l.b16 %v60
    %v215 = vunpack.c.l.b16 %v61
    %v216 = vunpack.c.l.b16 %v62
    %v217 = vunpack.c.l.b16 %v63
    %v218 = vunpack.c.l.b16 %v64
    %v219 = vunpack.c.l.b16 %v65
    %v220 = vunpack.c.l.b16 %v66
    %v221 = vunpack.c.l.b16 %v67
    %v222 = vunpack.c.l.b16 %v68
    %v223 = vunpack.c.l.b16 %v69
    %v224 = vunpack.c.l.b16 %v70
    %v225 = vunpack.c.l.b16 %v71
    %v226 = vunpack.c.l.b16 %v72
    %v227 = vunpack.c.l.b16 %v73
    %v228 = vunpack.c.l.b16 %v74
    %v229 = vunpack.c.l.b16 %v75
    %v230 = vunpack.c.l.b16 %v76
    %v231 = vunpack.c.l.b16 %v77
    %v232 = vunpack.c.l.b16 %v78
    %v233 = vunpack.c.l.b16 %v79
    %v234 = vunpack.c.l.b16 %v80
    %v235 = vpack.c.b16 %v172, %v171
    %v236 = vpack.c.b16 %v174, %v173
    %v237 = vpack.c.b16 %v176, %v175
    %v238 = vpack.c.b16 %v178, %v177
    %v239 = vpack.c.b16 %v180, %v179
    %v240 = vpack.c.b16 %v182, %v181
    %v241 = vpack.c.b16 %v184, %v183
    %v242 = vpack.c.b16 %v186, %v185
    %v243 = vpack.c.b16 %v188, %v187
    %v244 = vpack.c.b16 %v190, %v189
    %v245 = vpack.c.b16 %v192, %v191
    %v246 = vpack.c.b16 %v194, %v193
    %v247 = vpack.c.b16 %v196, %v195
    %v248 = vpack.c.b16 %v198, %v197
    %v249 = vpack.c.b16 %v200, %v199
    %v250 = vpack.c.b16 %v202, %v201
    %v251 = vpack.c.b16 %v204, %v203
    %v252 = vpack.c.b16 %v206, %v205
    %v253 = vpack.c.b16 %v208, %v207
    %v254 = vpack.c.b16 %v210, %v209
    %v255 = vpack.c.b16 %v212, %v211
    %v256 = vpack.c.b16 %v214, %v213
    %v257 = vpack.c.b16 %v216, %v215
    %v258 = vpack.c.b16 %v218, %v217
    %v259 = vpack.c.b16 %v220, %v219
    %v260 = vpack.c.b16 %v222, %v221
    %v261 = vpack.c.b16 %v224, %v223
    %v262 = vpack.c.b16 %v226, %v225
    %v263 = vpack.c.b16 %v228, %v227
    %v264 = vpack.c.b16 %v230, %v229
    %v265 = vpack.c.b16 %v232, %v231
    %v266 = vpack.c.b16 %v234, %v233
    %v276 = vunpack.c.l.b16 %v85
    %v277 = vunpack.c.h.b16 %v85
    %v278 = vunpack.c.l.b16 %v86
    %v279 = vunpack.c.h.b16 %v86
    %v280 = vunpack.c.l.b16 %v87
    %v281 = vunpack.c.h.b16 %v87
    %v282 = vunpack.c.l.b16 %v88
    %v283 = vunpack.c.h.b16 %v88
    %v284 = vunpack.c.l.b16 %v89
    %v285 = vunpack.c.h.b16 %v89
    %v286 = vunpack.c.l.b16 %v90
    %v287 = vunpack.c.h.b16 %v90
    %v288 = vunpack.c.l.b16 %v91
    %v289 = vunpack.c.h.b16 %v91
    %v290 = vunpack.c.l.b16 %v92
    %v291 = vunpack.c.h.b16 %v92
    %v292 = vunpack.c.l.b16 %v93
    %v293 = vunpack.c.h.b16 %v93
    %v294 = vpack.c.b16 %v278, %v276
    %v295 = vpack.c.b16 %v279, %v277
    %v296 = vpack.c.b16 %v282, %v280
    %v297 = vpack.c.b16 %v283, %v281
    %v298 = vpack.c.b16 %v286, %v284
    %v299 = vpack.c.b16 %v287, %v285
    %v300 = vpack.c.b16 %v290, %v288
    %v301 = vpack.c.b16 %v291, %v289
    %v302 = vpack.c.b16 %v292, %v292
    %v303 = vpack.c.b16 %v293, %v293
    %vm312 = vcmask 588800
    %v314 = vsel %vm312, %v235, 0
    %v317 = vsel %vm312, %v236, 0
    %v320 = vsel %vm312, %v237, 0
    %v323 = vsel %vm312, %v238, 0
    %v326 = vsel %vm312, %v239, 0
    %v329 = vsel %vm312, %v240, 0
    %v332 = vsel %vm312, %v241, 0
    %v335 = vsel %vm312, %v242, 0
    %v338 = vsel %vm312, %v243, 0
    %v341 = vsel %vm312, %v244, 0
    %v344 = vsel %vm312, %v245, 0
    %v347 = vsel %vm312, %v246, 0
    %v350 = vsel %vm312, %v247, 0
    %v353 = vsel %vm312, %v248, 0
    %v356 = vsel %vm312, %v249, 0
    %v359 = vsel %vm312, %v250, 0
    %v362 = vsel %vm312, %v251, 0
    %v365 = vsel %vm312, %v252, 0
    %v368 = vsel %vm312, %v253, 0
    %v371 = vsel %vm312, %v254, 0
    %v374 = vsel %vm312, %v255, 0
    %v377 = vsel %vm312, %v256, 0
    %v380 = vsel %vm312, %v257, 0
    %v383 = vsel %vm312, %v258, 0
    %v386 = vsel %vm312, %v259, 0
    %v389 = vsel %vm312, %v260, 0
    %v392 = vsel %vm312, %v261, 0
    %v395 = vsel %vm312, %v262, 0
    %v398 = vsel %vm312, %v263, 0
    %v401 = vsel %vm312, %v264, 0
    %v404 = vsel %vm312, %v265, 0
    %v407 = vsel %vm312, %v266, 0
    %vm409 = vcmask 1043456
    %v411 = vsel %vm409, %v302, 0
    %v414 = vsel %vm409, %v303, 0
    %416 = vmatprep.subr.bf16.mxu0 0
    %417 = vmatpush1.bf16.msra.mxu0 0
    %418 = vmatprep.subr.bf16.mxu0 0
    %419 = vmatpush1.bf16.msra.mxu0 0
    %420 = vmatprep.subr.bf16.mxu0 0
    %421 = vmatpush1.bf16.msra.mxu0 0
    %422 = vmatprep.subr.bf16.mxu0 %v414
    %423 = vmatpush1.bf16.msra.mxu0 %v411
    %424 = vmatprep.subr.bf16.mxu0 %v301
    %425 = vmatpush1.bf16.msra.mxu0 %v300
    %426 = vmatprep.subr.bf16.mxu0 %v299
    %427 = vmatpush1.bf16.msra.mxu0 %v298
    %428 = vmatprep.subr.bf16.mxu0 %v297
    %429 = vmatpush1.bf16.msra.mxu0 %v296
    %430 = vmatprep.subr.bf16.mxu0 %v295
    %431 = vmatpush1.bf16.msra.mxu0 %v294
    %432 = vmatprep.subr.bf16.mxu0 0
    %433 = vmatpush2.bf16.msra.mxu0 0
    %434 = vmatprep.subr.bf16.mxu0 0
    %435 = vmatpush2.bf16.msra.mxu0 0
    %436 = vmatprep.subr.bf16.mxu0 0
    %437 = vmatpush2.bf16.msra.mxu0 0
    %438 = vmatprep.subr.bf16.mxu0 0
    %439 = vmatpush2.bf16.msra.mxu0 0
    %440 = vmatprep.subr.bf16.mxu0 0
    %441 = vmatpush2.bf16.msra.mxu0 0
    %442 = vmatprep.subr.bf16.mxu0 0
    %443 = vmatpush2.bf16.msra.mxu0 0
    %444 = vmatprep.subr.bf16.mxu0 0
    %445 = vmatpush2.bf16.msra.mxu0 0
    %446 = vmatprep.subr.bf16.mxu0 0
    %447 = vmatpush2.bf16.msra.mxu0 0
    %448 = vmatprep.mubr.bf16.mxu0 0
    %449 = vmatmul.mubr.bf16.gmra.mxu0 %v314
    %v450 = vpop.f32.mrf.mxu0
    %v451 = vadd.f32 %v100, %v450
    %v452 = vpop.f32.mrf.mxu0
    %v453 = vadd.f32 %v104, %v452
    %v454 = vpop.f32.mrf.mxu0
    %v455 = vadd.f32 %v100, %v454
    %v456 = vpop.f32.mrf.mxu0
    %v457 = vadd.f32 %v104, %v456
    %458 = vmatprep.mubr.bf16.mxu0 0
    %459 = vmatmul.mubr.bf16.gmra.mxu0 %v317
    %v460 = vpop.f32.mrf.mxu0
    %v461 = vadd.f32 %v100, %v460
    %v462 = vpop.f32.mrf.mxu0
    %v463 = vadd.f32 %v104, %v462
    %v464 = vpop.f32.mrf.mxu0
    %v465 = vadd.f32 %v100, %v464
    %v466 = vpop.f32.mrf.mxu0
    %v467 = vadd.f32 %v104, %v466
    %468 = vmatprep.mubr.bf16.mxu0 0
    %469 = vmatmul.mubr.bf16.gmra.mxu0 %v320
    %v470 = vpop.f32.mrf.mxu0
    %v471 = vadd.f32 %v100, %v470
    %v472 = vpop.f32.mrf.mxu0
    %v473 = vadd.f32 %v104, %v472
    %v474 = vpop.f32.mrf.mxu0
    %v475 = vadd.f32 %v100, %v474
    %v476 = vpop.f32.mrf.mxu0
    %v477 = vadd.f32 %v104, %v476
    %478 = vmatprep.mubr.bf16.mxu0 0
    %479 = vmatmul.mubr.bf16.gmra.mxu0 %v323
    %v480 = vpop.f32.mrf.mxu0
    %v481 = vadd.f32 %v100, %v480
    %v482 = vpop.f32.mrf.mxu0
    %v483 = vadd.f32 %v104, %v482
    %v484 = vpop.f32.mrf.mxu0
    %v485 = vadd.f32 %v100, %v484
    %v486 = vpop.f32.mrf.mxu0
    %v487 = vadd.f32 %v104, %v486
    %488 = vmatprep.mubr.bf16.mxu0 0
    %489 = vmatmul.mubr.bf16.gmra.mxu0 %v326
    %v490 = vpop.f32.mrf.mxu0
    %v491 = vadd.f32 %v100, %v490
    %v492 = vpop.f32.mrf.mxu0
    %v493 = vadd.f32 %v104, %v492
    %v494 = vpop.f32.mrf.mxu0
    %v495 = vadd.f32 %v100, %v494
    %v496 = vpop.f32.mrf.mxu0
    %v497 = vadd.f32 %v104, %v496
    %498 = vmatprep.mubr.bf16.mxu0 0
    %499 = vmatmul.mubr.bf16.gmra.mxu0 %v329
    %v500 = vpop.f32.mrf.mxu0
    %v501 = vadd.f32 %v100, %v500
    %v502 = vpop.f32.mrf.mxu0
    %v503 = vadd.f32 %v104, %v502
    %v504 = vpop.f32.mrf.mxu0
    %v505 = vadd.f32 %v100, %v504
    %v506 = vpop.f32.mrf.mxu0
    %v507 = vadd.f32 %v104, %v506
    %508 = vmatprep.mubr.bf16.mxu0 0
    %509 = vmatmul.mubr.bf16.gmra.mxu0 %v332
    %v510 = vpop.f32.mrf.mxu0
    %v511 = vadd.f32 %v100, %v510
    %v512 = vpop.f32.mrf.mxu0
    %v513 = vadd.f32 %v104, %v512
    %v514 = vpop.f32.mrf.mxu0
    %v515 = vadd.f32 %v100, %v514
    %v516 = vpop.f32.mrf.mxu0
    %v517 = vadd.f32 %v104, %v516
    %518 = vmatprep.mubr.bf16.mxu0 0
    %519 = vmatmul.mubr.bf16.gmra.mxu0 %v335
    %v520 = vpop.f32.mrf.mxu0
    %v521 = vadd.f32 %v100, %v520
    %v522 = vpop.f32.mrf.mxu0
    %v523 = vadd.f32 %v104, %v522
    %v524 = vpop.f32.mrf.mxu0
    %v525 = vadd.f32 %v100, %v524
    %v526 = vpop.f32.mrf.mxu0
    %v527 = vadd.f32 %v104, %v526
    %528 = vmatprep.mubr.bf16.mxu0 0
    %529 = vmatmul.mubr.bf16.gmra.mxu0 %v338
    %v530 = vpop.f32.mrf.mxu0
    %v531 = vadd.f32 %v100, %v530
    %v532 = vpop.f32.mrf.mxu0
    %v533 = vadd.f32 %v104, %v532
    %v534 = vpop.f32.mrf.mxu0
    %v535 = vadd.f32 %v100, %v534
    %v536 = vpop.f32.mrf.mxu0
    %v537 = vadd.f32 %v104, %v536
    %538 = vmatprep.mubr.bf16.mxu0 0
    %539 = vmatmul.mubr.bf16.gmra.mxu0 %v341
    %v540 = vpop.f32.mrf.mxu0
    %v541 = vadd.f32 %v100, %v540
    %v542 = vpop.f32.mrf.mxu0
    %v543 = vadd.f32 %v104, %v542
    %v544 = vpop.f32.mrf.mxu0
    %v545 = vadd.f32 %v100, %v544
    %v546 = vpop.f32.mrf.mxu0
    %v547 = vadd.f32 %v104, %v546
    %548 = vmatprep.mubr.bf16.mxu0 0
    %549 = vmatmul.mubr.bf16.gmra.mxu0 %v344
    %v550 = vpop.f32.mrf.mxu0
    %v551 = vadd.f32 %v100, %v550
    %v552 = vpop.f32.mrf.mxu0
    %v553 = vadd.f32 %v104, %v552
    %v554 = vpop.f32.mrf.mxu0
    %v555 = vadd.f32 %v100, %v554
    %v556 = vpop.f32.mrf.mxu0
    %v557 = vadd.f32 %v104, %v556
    %558 = vmatprep.mubr.bf16.mxu0 0
    %559 = vmatmul.mubr.bf16.gmra.mxu0 %v347
    %v560 = vpop.f32.mrf.mxu0
    %v561 = vadd.f32 %v100, %v560
    %v562 = vpop.f32.mrf.mxu0
    %v563 = vadd.f32 %v104, %v562
    %v564 = vpop.f32.mrf.mxu0
    %v565 = vadd.f32 %v100, %v564
    %v566 = vpop.f32.mrf.mxu0
    %v567 = vadd.f32 %v104, %v566
    %568 = vmatprep.mubr.bf16.mxu0 0
    %569 = vmatmul.mubr.bf16.gmra.mxu0 %v350
    %v570 = vpop.f32.mrf.mxu0
    %v571 = vadd.f32 %v100, %v570
    %v572 = vpop.f32.mrf.mxu0
    %v573 = vadd.f32 %v104, %v572
    %v574 = vpop.f32.mrf.mxu0
    %v575 = vadd.f32 %v100, %v574
    %v576 = vpop.f32.mrf.mxu0
    %v577 = vadd.f32 %v104, %v576
    %578 = vmatprep.mubr.bf16.mxu0 0
    %579 = vmatmul.mubr.bf16.gmra.mxu0 %v353
    %v580 = vpop.f32.mrf.mxu0
    %v581 = vadd.f32 %v100, %v580
    %v582 = vpop.f32.mrf.mxu0
    %v583 = vadd.f32 %v104, %v582
    %v584 = vpop.f32.mrf.mxu0
    %v585 = vadd.f32 %v100, %v584
    %v586 = vpop.f32.mrf.mxu0
    %v587 = vadd.f32 %v104, %v586
    %588 = vmatprep.mubr.bf16.mxu0 0
    %589 = vmatmul.mubr.bf16.gmra.mxu0 %v356
    %v590 = vpop.f32.mrf.mxu0
    %v591 = vadd.f32 %v100, %v590
    %v592 = vpop.f32.mrf.mxu0
    %v593 = vadd.f32 %v104, %v592
    %v594 = vpop.f32.mrf.mxu0
    %v595 = vadd.f32 %v100, %v594
    %v596 = vpop.f32.mrf.mxu0
    %v597 = vadd.f32 %v104, %v596
    %598 = vmatprep.mubr.bf16.mxu0 0
    %599 = vmatmul.mubr.bf16.gmra.mxu0 %v359
    %v600 = vpop.f32.mrf.mxu0
    %v601 = vadd.f32 %v100, %v600
    %v602 = vpop.f32.mrf.mxu0
    %v603 = vadd.f32 %v104, %v602
    %v604 = vpop.f32.mrf.mxu0
    %v605 = vadd.f32 %v100, %v604
    %v606 = vpop.f32.mrf.mxu0
    %v607 = vadd.f32 %v104, %v606
    %608 = vmatprep.mubr.bf16.mxu0 0
    %609 = vmatmul.mubr.bf16.gmra.mxu0 %v362
    %v610 = vpop.f32.mrf.mxu0
    %v611 = vadd.f32 %v100, %v610
    %v612 = vpop.f32.mrf.mxu0
    %v613 = vadd.f32 %v104, %v612
    %v614 = vpop.f32.mrf.mxu0
    %v615 = vadd.f32 %v100, %v614
    %v616 = vpop.f32.mrf.mxu0
    %v617 = vadd.f32 %v104, %v616
    %618 = vmatprep.mubr.bf16.mxu0 0
    %619 = vmatmul.mubr.bf16.gmra.mxu0 %v365
    %v620 = vpop.f32.mrf.mxu0
    %v621 = vadd.f32 %v100, %v620
    %v622 = vpop.f32.mrf.mxu0
    %v623 = vadd.f32 %v104, %v622
    %v624 = vpop.f32.mrf.mxu0
    %v625 = vadd.f32 %v100, %v624
    %v626 = vpop.f32.mrf.mxu0
    %v627 = vadd.f32 %v104, %v626
    %628 = vmatprep.mubr.bf16.mxu0 0
    %629 = vmatmul.mubr.bf16.gmra.mxu0 %v368
    %v630 = vpop.f32.mrf.mxu0
    %v631 = vadd.f32 %v100, %v630
    %v632 = vpop.f32.mrf.mxu0
    %v633 = vadd.f32 %v104, %v632
    %v634 = vpop.f32.mrf.mxu0
    %v635 = vadd.f32 %v100, %v634
    %v636 = vpop.f32.mrf.mxu0
    %v637 = vadd.f32 %v104, %v636
    %638 = vmatprep.mubr.bf16.mxu0 0
    %639 = vmatmul.mubr.bf16.gmra.mxu0 %v371
    %v640 = vpop.f32.mrf.mxu0
    %v641 = vadd.f32 %v100, %v640
    %v642 = vpop.f32.mrf.mxu0
    %v643 = vadd.f32 %v104, %v642
    %v644 = vpop.f32.mrf.mxu0
    %v645 = vadd.f32 %v100, %v644
    %v646 = vpop.f32.mrf.mxu0
    %v647 = vadd.f32 %v104, %v646
    %648 = vmatprep.mubr.bf16.mxu0 0
    %649 = vmatmul.mubr.bf16.gmra.mxu0 %v374
    %v650 = vpop.f32.mrf.mxu0
    %v651 = vadd.f32 %v100, %v650
    %v652 = vpop.f32.mrf.mxu0
    %v653 = vadd.f32 %v104, %v652
    %v654 = vpop.f32.mrf.mxu0
    %v655 = vadd.f32 %v100, %v654
    %v656 = vpop.f32.mrf.mxu0
    %v657 = vadd.f32 %v104, %v656
    %658 = vmatprep.mubr.bf16.mxu0 0
    %659 = vmatmul.mubr.bf16.gmra.mxu0 %v377
    %v660 = vpop.f32.mrf.mxu0
    %v661 = vadd.f32 %v100, %v660
    %v662 = vpop.f32.mrf.mxu0
    %v663 = vadd.f32 %v104, %v662
    %v664 = vpop.f32.mrf.mxu0
    %v665 = vadd.f32 %v100, %v664
    %v666 = vpop.f32.mrf.mxu0
    %v667 = vadd.f32 %v104, %v666
    %668 = vmatprep.mubr.bf16.mxu0 0
    %669 = vmatmul.mubr.bf16.gmra.mxu0 %v380
    %v670 = vpop.f32.mrf.mxu0
    %v671 = vadd.f32 %v100, %v670
    %v672 = vpop.f32.mrf.mxu0
    %v673 = vadd.f32 %v104, %v672
    %v674 = vpop.f32.mrf.mxu0
    %v675 = vadd.f32 %v100, %v674
    %v676 = vpop.f32.mrf.mxu0
    %v677 = vadd.f32 %v104, %v676
    %678 = vmatprep.mubr.bf16.mxu0 0
    %679 = vmatmul.mubr.bf16.gmra.mxu0 %v383
    %v680 = vpop.f32.mrf.mxu0
    %v681 = vadd.f32 %v100, %v680
    %v682 = vpop.f32.mrf.mxu0
    %v683 = vadd.f32 %v104, %v682
    %v684 = vpop.f32.mrf.mxu0
    %v685 = vadd.f32 %v100, %v684
    %v686 = vpop.f32.mrf.mxu0
    %v687 = vadd.f32 %v104, %v686
    %688 = vmatprep.mubr.bf16.mxu0 0
    %689 = vmatmul.mubr.bf16.gmra.mxu0 %v386
    %v690 = vpop.f32.mrf.mxu0
    %v691 = vadd.f32 %v100, %v690
    %v692 = vpop.f32.mrf.mxu0
    %v693 = vadd.f32 %v104, %v692
    %v694 = vpop.f32.mrf.mxu0
    %v695 = vadd.f32 %v100, %v694
    %v696 = vpop.f32.mrf.mxu0
    %v697 = vadd.f32 %v104, %v696
    %698 = vmatprep.mubr.bf16.mxu0 0
    %699 = vmatmul.mubr.bf16.gmra.mxu0 %v389
    %v700 = vpop.f32.mrf.mxu0
    %v701 = vadd.f32 %v100, %v700
    %v702 = vpop.f32.mrf.mxu0
    %v703 = vadd.f32 %v104, %v702
    %v704 = vpop.f32.mrf.mxu0
    %v705 = vadd.f32 %v100, %v704
    %v706 = vpop.f32.mrf.mxu0
    %v707 = vadd.f32 %v104, %v706
    %708 = vmatprep.mubr.bf16.mxu0 0
    %709 = vmatmul.mubr.bf16.gmra.mxu0 %v392
    %v710 = vpop.f32.mrf.mxu0
    %v711 = vadd.f32 %v100, %v710
    %v712 = vpop.f32.mrf.mxu0
    %v713 = vadd.f32 %v104, %v712
    %v714 = vpop.f32.mrf.mxu0
    %v715 = vadd.f32 %v100, %v714
    %v716 = vpop.f32.mrf.mxu0
    %v717 = vadd.f32 %v104, %v716
    %718 = vmatprep.mubr.bf16.mxu0 0
    %719 = vmatmul.mubr.bf16.gmra.mxu0 %v395
    %v720 = vpop.f32.mrf.mxu0
    %v721 = vadd.f32 %v100, %v720
    %v722 = vpop.f32.mrf.mxu0
    %v723 = vadd.f32 %v104, %v722
    %v724 = vpop.f32.mrf.mxu0
    %v725 = vadd.f32 %v100, %v724
    %v726 = vpop.f32.mrf.mxu0
    %v727 = vadd.f32 %v104, %v726
    %728 = vmatprep.mubr.bf16.mxu0 0
    %729 = vmatmul.mubr.bf16.gmra.mxu0 %v398
    %v730 = vpop.f32.mrf.mxu0
    %v731 = vadd.f32 %v100, %v730
    %v732 = vpop.f32.mrf.mxu0
    %v733 = vadd.f32 %v104, %v732
    %v734 = vpop.f32.mrf.mxu0
    %v735 = vadd.f32 %v100, %v734
    %v736 = vpop.f32.mrf.mxu0
    %v737 = vadd.f32 %v104, %v736
    %738 = vmatprep.mubr.bf16.mxu0 0
    %739 = vmatmul.mubr.bf16.gmra.mxu0 %v401
    %v740 = vpop.f32.mrf.mxu0
    %v741 = vadd.f32 %v100, %v740
    %v742 = vpop.f32.mrf.mxu0
    %v743 = vadd.f32 %v104, %v742
    %v744 = vpop.f32.mrf.mxu0
    %v745 = vadd.f32 %v100, %v744
    %v746 = vpop.f32.mrf.mxu0
    %v747 = vadd.f32 %v104, %v746
    %748 = vmatprep.mubr.bf16.mxu0 0
    %749 = vmatmul.mubr.bf16.gmra.mxu0 %v404
    %v750 = vpop.f32.mrf.mxu0
    %v751 = vadd.f32 %v100, %v750
    %v752 = vpop.f32.mrf.mxu0
    %v753 = vadd.f32 %v104, %v752
    %v754 = vpop.f32.mrf.mxu0
    %v755 = vadd.f32 %v100, %v754
    %v756 = vpop.f32.mrf.mxu0
    %v757 = vadd.f32 %v104, %v756
    %758 = vmatprep.mubr.bf16.mxu0 0
    %759 = vmatmul.mubr.bf16.gmra.mxu0 %v407
    %v760 = vpop.f32.mrf.mxu0
    %v761 = vadd.f32 %v100, %v760
    %v762 = vpop.f32.mrf.mxu0
    %v763 = vadd.f32 %v104, %v762
    %v764 = vpop.f32.mrf.mxu0
    %v765 = vadd.f32 %v100, %v764
    %v766 = vpop.f32.mrf.mxu0
    %v767 = vadd.f32 %v104, %v766
    %768 = vdwg.mxu0
    %v769 = vpack.c.bf16 %v455, %v451
    %v770 = vpack.c.bf16 %v457, %v453
    %v771 = vpack.c.bf16 %v465, %v461
    %v772 = vpack.c.bf16 %v467, %v463
    %v773 = vpack.c.bf16 %v475, %v471
    %v774 = vpack.c.bf16 %v477, %v473
    %v775 = vpack.c.bf16 %v485, %v481
    %v776 = vpack.c.bf16 %v487, %v483
    %v777 = vpack.c.bf16 %v495, %v491
    %v778 = vpack.c.bf16 %v497, %v493
    %v779 = vpack.c.bf16 %v505, %v501
    %v780 = vpack.c.bf16 %v507, %v503
    %v781 = vpack.c.bf16 %v515, %v511
    %v782 = vpack.c.bf16 %v517, %v513
    %v783 = vpack.c.bf16 %v525, %v521
    %v784 = vpack.c.bf16 %v527, %v523
    %v785 = vpack.c.bf16 %v535, %v531
    %v786 = vpack.c.bf16 %v537, %v533
    %v787 = vpack.c.bf16 %v545, %v541
    %v788 = vpack.c.bf16 %v547, %v543
    %v789 = vpack.c.bf16 %v555, %v551
    %v790 = vpack.c.bf16 %v557, %v553
    %v791 = vpack.c.bf16 %v565, %v561
    %v792 = vpack.c.bf16 %v567, %v563
    %v793 = vpack.c.bf16 %v575, %v571
    %v794 = vpack.c.bf16 %v577, %v573
    %v795 = vpack.c.bf16 %v585, %v581
    %v796 = vpack.c.bf16 %v587, %v583
    %v797 = vpack.c.bf16 %v595, %v591
    %v798 = vpack.c.bf16 %v597, %v593
    %v799 = vpack.c.bf16 %v605, %v601
    %v800 = vpack.c.bf16 %v607, %v603
    %v801 = vpack.c.bf16 %v615, %v611
    %v802 = vpack.c.bf16 %v617, %v613
    %v803 = vpack.c.bf16 %v625, %v621
    %v804 = vpack.c.bf16 %v627, %v623
    %v805 = vpack.c.bf16 %v635, %v631
    %v806 = vpack.c.bf16 %v637, %v633
    %v807 = vpack.c.bf16 %v645, %v641
    %v808 = vpack.c.bf16 %v647, %v643
    %v809 = vpack.c.bf16 %v655, %v651
    %v810 = vpack.c.bf16 %v657, %v653
    %v811 = vpack.c.bf16 %v665, %v661
    %v812 = vpack.c.bf16 %v667, %v663
    %v813 = vpack.c.bf16 %v675, %v671
    %v814 = vpack.c.bf16 %v677, %v673
    %v815 = vpack.c.bf16 %v685, %v681
    %v816 = vpack.c.bf16 %v687, %v683
    %v817 = vpack.c.bf16 %v695, %v691
    %v818 = vpack.c.bf16 %v697, %v693
    %v819 = vpack.c.bf16 %v705, %v701
    %v820 = vpack.c.bf16 %v707, %v703
    %v821 = vpack.c.bf16 %v715, %v711
    %v822 = vpack.c.bf16 %v717, %v713
    %v823 = vpack.c.bf16 %v725, %v721
    %v824 = vpack.c.bf16 %v727, %v723
    %v825 = vpack.c.bf16 %v735, %v731
    %v826 = vpack.c.bf16 %v737, %v733
    %v827 = vpack.c.bf16 %v745, %v741
    %v828 = vpack.c.bf16 %v747, %v743
    %v829 = vpack.c.bf16 %v755, %v751
    %v830 = vpack.c.bf16 %v757, %v753
    %v831 = vpack.c.bf16 %v765, %v761
    %v832 = vpack.c.bf16 %v767, %v763
    %v897 = vunpack.c.l.b16 %v769
    %v898 = vunpack.c.l.b16 %v770
    %v899 = vunpack.c.h.b16 %v769
    %v900 = vunpack.c.h.b16 %v770
    %v901 = vunpack.c.l.b16 %v771
    %v902 = vunpack.c.l.b16 %v772
    %v903 = vunpack.c.h.b16 %v771
    %v904 = vunpack.c.h.b16 %v772
    %v905 = vunpack.c.l.b16 %v773
    %v906 = vunpack.c.l.b16 %v774
    %v907 = vunpack.c.h.b16 %v773
    %v908 = vunpack.c.h.b16 %v774
    %v909 = vunpack.c.l.b16 %v775
    %v910 = vunpack.c.l.b16 %v776
    %v911 = vunpack.c.h.b16 %v775
    %v912 = vunpack.c.h.b16 %v776
    %v913 = vunpack.c.l.b16 %v777
    %v914 = vunpack.c.l.b16 %v778
    %v915 = vunpack.c.h.b16 %v777
    %v916 = vunpack.c.h.b16 %v778
    %v917 = vunpack.c.l.b16 %v779
    %v918 = vunpack.c.l.b16 %v780
    %v919 = vunpack.c.h.b16 %v779
    %v920 = vunpack.c.h.b16 %v780
    %v921 = vunpack.c.l.b16 %v781
    %v922 = vunpack.c.l.b16 %v782
    %v923 = vunpack.c.h.b16 %v781
    %v924 = vunpack.c.h.b16 %v782
    %v925 = vunpack.c.l.b16 %v783
    %v926 = vunpack.c.l.b16 %v784
    %v927 = vunpack.c.h.b16 %v783
    %v928 = vunpack.c.h.b16 %v784
    %v929 = vunpack.c.l.b16 %v785
    %v930 = vunpack.c.l.b16 %v786
    %v931 = vunpack.c.h.b16 %v785
    %v932 = vunpack.c.h.b16 %v786
    %v933 = vunpack.c.l.b16 %v787
    %v934 = vunpack.c.l.b16 %v788
    %v935 = vunpack.c.h.b16 %v787
    %v936 = vunpack.c.h.b16 %v788
    %v937 = vunpack.c.l.b16 %v789
    %v938 = vunpack.c.l.b16 %v790
    %v939 = vunpack.c.h.b16 %v789
    %v940 = vunpack.c.h.b16 %v790
    %v941 = vunpack.c.l.b16 %v791
    %v942 = vunpack.c.l.b16 %v792
    %v943 = vunpack.c.h.b16 %v791
    %v944 = vunpack.c.h.b16 %v792
    %v945 = vunpack.c.l.b16 %v793
    %v946 = vunpack.c.l.b16 %v794
    %v947 = vunpack.c.h.b16 %v793
    %v948 = vunpack.c.h.b16 %v794
    %v949 = vunpack.c.l.b16 %v795
    %v950 = vunpack.c.l.b16 %v796
    %v951 = vunpack.c.h.b16 %v795
    %v952 = vunpack.c.h.b16 %v796
    %v953 = vunpack.c.l.b16 %v797
    %v954 = vunpack.c.l.b16 %v798
    %v955 = vunpack.c.h.b16 %v797
    %v956 = vunpack.c.h.b16 %v798
    %v957 = vunpack.c.l.b16 %v799
    %v958 = vunpack.c.l.b16 %v800
    %v959 = vunpack.c.h.b16 %v799
    %v960 = vunpack.c.h.b16 %v800
    %v961 = vunpack.c.l.b16 %v801
    %v962 = vunpack.c.l.b16 %v802
    %v963 = vunpack.c.h.b16 %v801
    %v964 = vunpack.c.h.b16 %v802
    %v965 = vunpack.c.l.b16 %v803
    %v966 = vunpack.c.l.b16 %v804
    %v967 = vunpack.c.h.b16 %v803
    %v968 = vunpack.c.h.b16 %v804
    %v969 = vunpack.c.l.b16 %v805
    %v970 = vunpack.c.l.b16 %v806
    %v971 = vunpack.c.h.b16 %v805
    %v972 = vunpack.c.h.b16 %v806
    %v973 = vunpack.c.l.b16 %v807
    %v974 = vunpack.c.l.b16 %v808
    %v975 = vunpack.c.h.b16 %v807
    %v976 = vunpack.c.h.b16 %v808
    %v977 = vunpack.c.l.b16 %v809
    %v978 = vunpack.c.l.b16 %v810
    %v979 = vunpack.c.h.b16 %v809
    %v980 = vunpack.c.h.b16 %v810
    %v981 = vunpack.c.l.b16 %v811
    %v982 = vunpack.c.l.b16 %v812
    %v983 = vunpack.c.h.b16 %v811
    %v984 = vunpack.c.h.b16 %v812
    %v985 = vunpack.c.l.b16 %v813
    %v986 = vunpack.c.l.b16 %v814
    %v987 = vunpack.c.h.b16 %v813
    %v988 = vunpack.c.h.b16 %v814
    %v989 = vunpack.c.l.b16 %v815
    %v990 = vunpack.c.l.b16 %v816
    %v991 = vunpack.c.h.b16 %v815
    %v992 = vunpack.c.h.b16 %v816
    %v993 = vunpack.c.l.b16 %v817
    %v994 = vunpack.c.l.b16 %v818
    %v995 = vunpack.c.h.b16 %v817
    %v996 = vunpack.c.h.b16 %v818
    %v997 = vunpack.c.l.b16 %v819
    %v998 = vunpack.c.l.b16 %v820
    %v999 = vunpack.c.h.b16 %v819
    %v1000 = vunpack.c.h.b16 %v820
    %v1001 = vunpack.c.l.b16 %v821
    %v1002 = vunpack.c.l.b16 %v822
    %v1003 = vunpack.c.h.b16 %v821
    %v1004 = vunpack.c.h.b16 %v822
    %v1005 = vunpack.c.l.b16 %v823
    %v1006 = vunpack.c.l.b16 %v824
    %v1007 = vunpack.c.h.b16 %v823
    %v1008 = vunpack.c.h.b16 %v824
    %v1009 = vunpack.c.l.b16 %v825
    %v1010 = vunpack.c.l.b16 %v826
    %v1011 = vunpack.c.h.b16 %v825
    %v1012 = vunpack.c.h.b16 %v826
    %v1013 = vunpack.c.l.b16 %v827
    %v1014 = vunpack.c.l.b16 %v828
    %v1015 = vunpack.c.h.b16 %v827
    %v1016 = vunpack.c.h.b16 %v828
    %v1017 = vunpack.c.l.b16 %v829
    %v1018 = vunpack.c.l.b16 %v830
    %v1019 = vunpack.c.h.b16 %v829
    %v1020 = vunpack.c.h.b16 %v830
    %v1021 = vunpack.c.l.b16 %v831
    %v1022 = vunpack.c.l.b16 %v832
    %v1023 = vunpack.c.h.b16 %v831
    %v1024 = vunpack.c.h.b16 %v832
    %v1025 = vpack.c.b16 %v898, %v897
    %v1026 = vpack.c.b16 %v900, %v899
    %v1027 = vpack.c.b16 %v902, %v901
    %v1028 = vpack.c.b16 %v904, %v903
    %v1029 = vpack.c.b16 %v906, %v905
    %v1030 = vpack.c.b16 %v908, %v907
    %v1031 = vpack.c.b16 %v910, %v909
    %v1032 = vpack.c.b16 %v912, %v911
    %v1033 = vpack.c.b16 %v914, %v913
    %v1034 = vpack.c.b16 %v916, %v915
    %v1035 = vpack.c.b16 %v918, %v917
    %v1036 = vpack.c.b16 %v920, %v919
    %v1037 = vpack.c.b16 %v922, %v921
    %v1038 = vpack.c.b16 %v924, %v923
    %v1039 = vpack.c.b16 %v926, %v925
    %v1040 = vpack.c.b16 %v928, %v927
    %v1041 = vpack.c.b16 %v930, %v929
    %v1042 = vpack.c.b16 %v932, %v931
    %v1043 = vpack.c.b16 %v934, %v933
    %v1044 = vpack.c.b16 %v936, %v935
    %v1045 = vpack.c.b16 %v938, %v937
    %v1046 = vpack.c.b16 %v940, %v939
    %v1047 = vpack.c.b16 %v942, %v941
    %v1048 = vpack.c.b16 %v944, %v943
    %v1049 = vpack.c.b16 %v946, %v945
    %v1050 = vpack.c.b16 %v948, %v947
    %v1051 = vpack.c.b16 %v950, %v949
    %v1052 = vpack.c.b16 %v952, %v951
    %v1053 = vpack.c.b16 %v954, %v953
    %v1054 = vpack.c.b16 %v956, %v955
    %v1055 = vpack.c.b16 %v958, %v957
    %v1056 = vpack.c.b16 %v960, %v959
    %v1057 = vpack.c.b16 %v962, %v961
    %v1058 = vpack.c.b16 %v964, %v963
    %v1059 = vpack.c.b16 %v966, %v965
    %v1060 = vpack.c.b16 %v968, %v967
    %v1061 = vpack.c.b16 %v970, %v969
    %v1062 = vpack.c.b16 %v972, %v971
    %v1063 = vpack.c.b16 %v974, %v973
    %v1064 = vpack.c.b16 %v976, %v975
    %v1065 = vpack.c.b16 %v978, %v977
    %v1066 = vpack.c.b16 %v980, %v979
    %v1067 = vpack.c.b16 %v982, %v981
    %v1068 = vpack.c.b16 %v984, %v983
    %v1069 = vpack.c.b16 %v986, %v985
    %v1070 = vpack.c.b16 %v988, %v987
    %v1071 = vpack.c.b16 %v990, %v989
    %v1072 = vpack.c.b16 %v992, %v991
    %v1073 = vpack.c.b16 %v994, %v993
    %v1074 = vpack.c.b16 %v996, %v995
    %v1075 = vpack.c.b16 %v998, %v997
    %v1076 = vpack.c.b16 %v1000, %v999
    %v1077 = vpack.c.b16 %v1002, %v1001
    %v1078 = vpack.c.b16 %v1004, %v1003
    %v1079 = vpack.c.b16 %v1006, %v1005
    %v1080 = vpack.c.b16 %v1008, %v1007
    %v1081 = vpack.c.b16 %v1010, %v1009
    %v1082 = vpack.c.b16 %v1012, %v1011
    %v1083 = vpack.c.b16 %v1014, %v1013
    %v1084 = vpack.c.b16 %v1016, %v1015
    %v1085 = vpack.c.b16 %v1018, %v1017
    %v1086 = vpack.c.b16 %v1020, %v1019
    %v1087 = vpack.c.b16 %v1022, %v1021
    %v1088 = vpack.c.b16 %v1024, %v1023
    %1153 = vst [vmem:[#allocation2] sm:$0xff] %v1025
    %1154 = vst [vmem:[#allocation2 + $0x8] sm:$0xff] %v1026
    %1155 = vst [vmem:[#allocation2 + $0x10] sm:$0xff] %v1027
    %1156 = vst [vmem:[#allocation2 + $0x18] sm:$0xff] %v1028
    %1157 = vst [vmem:[#allocation2 + $0x20] sm:$0xff] %v1029
    %1158 = vst [vmem:[#allocation2 + $0x28] sm:$0xff] %v1030
    %1159 = vst [vmem:[#allocation2 + $0x30] sm:$0xff] %v1031
    %1160 = vst [vmem:[#allocation2 + $0x38] sm:$0xff] %v1032
    %1161 = vst [vmem:[#allocation2 + $0x40] sm:$0xff] %v1033
    %1162 = vst [vmem:[#allocation2 + $0x48] sm:$0xff] %v1034
    %1163 = vst [vmem:[#allocation2 + $0x50] sm:$0xff] %v1035
    %1164 = vst [vmem:[#allocation2 + $0x58] sm:$0xff] %v1036
    %1165 = vst [vmem:[#allocation2 + $0x60] sm:$0xff] %v1037
    %1166 = vst [vmem:[#allocation2 + $0x68] sm:$0xff] %v1038
    %1167 = vst [vmem:[#allocation2 + $0x70] sm:$0xff] %v1039
    %1168 = vst [vmem:[#allocation2 + $0x78] sm:$0xff] %v1040
    %1169 = vst [vmem:[#allocation2 + $0x80] sm:$0xff] %v1041
    %1170 = vst [vmem:[#allocation2 + $0x88] sm:$0xff] %v1042
    %1171 = vst [vmem:[#allocation2 + $0x90] sm:$0xff] %v1043
    %1172 = vst [vmem:[#allocation2 + $0x98] sm:$0xff] %v1044
    %1173 = vst [vmem:[#allocation2 + $0xa0] sm:$0xff] %v1045
    %1174 = vst [vmem:[#allocation2 + $0xa8] sm:$0xff] %v1046
    %1175 = vst [vmem:[#allocation2 + $0xb0] sm:$0xff] %v1047
    %1176 = vst [vmem:[#allocation2 + $0xb8] sm:$0xff] %v1048
    %1177 = vst [vmem:[#allocation2 + $0xc0] sm:$0xff] %v1049
    %1178 = vst [vmem:[#allocation2 + $0xc8] sm:$0xff] %v1050
    %1179 = vst [vmem:[#allocation2 + $0xd0] sm:$0xff] %v1051
    %1180 = vst [vmem:[#allocation2 + $0xd8] sm:$0xff] %v1052
    %1181 = vst [vmem:[#allocation2 + $0xe0] sm:$0xff] %v1053
    %1182 = vst [vmem:[#allocation2 + $0xe8] sm:$0xff] %v1054
    %1183 = vst [vmem:[#allocation2 + $0xf0] sm:$0xff] %v1055
    %1184 = vst [vmem:[#allocation2 + $0xf8] sm:$0xff] %v1056
    %1185 = vst [vmem:[#allocation2 + $0x100] sm:$0xff] %v1057
    %1186 = vst [vmem:[#allocation2 + $0x108] sm:$0xff] %v1058
    %1187 = vst [vmem:[#allocation2 + $0x110] sm:$0xff] %v1059
    %1188 = vst [vmem:[#allocation2 + $0x118] sm:$0xff] %v1060
    %1189 = vst [vmem:[#allocation2 + $0x120] sm:$0xff] %v1061
    %1190 = vst [vmem:[#allocation2 + $0x128] sm:$0xff] %v1062
    %1191 = vst [vmem:[#allocation2 + $0x130] sm:$0xff] %v1063
    %1192 = vst [vmem:[#allocation2 + $0x138] sm:$0xff] %v1064
    %1193 = vst [vmem:[#allocation2 + $0x140] sm:$0xff] %v1065
    %1194 = vst [vmem:[#allocation2 + $0x148] sm:$0xff] %v1066
    %1195 = vst [vmem:[#allocation2 + $0x150] sm:$0xff] %v1067
    %1196 = vst [vmem:[#allocation2 + $0x158] sm:$0xff] %v1068
    %1197 = vst [vmem:[#allocation2 + $0x160] sm:$0xff] %v1069
    %1198 = vst [vmem:[#allocation2 + $0x168] sm:$0xff] %v1070
    %1199 = vst [vmem:[#allocation2 + $0x170] sm:$0xff] %v1071
    %1200 = vst [vmem:[#allocation2 + $0x178] sm:$0xff] %v1072
    %1201 = vst [vmem:[#allocation2 + $0x180] sm:$0xff] %v1073
    %1202 = vst [vmem:[#allocation2 + $0x188] sm:$0xff] %v1074
    %1203 = vst [vmem:[#allocation2 + $0x190] sm:$0xff] %v1075
    %1204 = vst [vmem:[#allocation2 + $0x198] sm:$0xff] %v1076
    %1205 = vst [vmem:[#allocation2 + $0x1a0] sm:$0xff] %v1077
    %1206 = vst [vmem:[#allocation2 + $0x1a8] sm:$0xff] %v1078
    %1207 = vst [vmem:[#allocation2 + $0x1b0] sm:$0xff] %v1079
    %1208 = vst [vmem:[#allocation2 + $0x1b8] sm:$0xff] %v1080
    %1209 = vst [vmem:[#allocation2 + $0x1c0] sm:$0xff] %v1081
    %1210 = vst [vmem:[#allocation2 + $0x1c8] sm:$0xff] %v1082
    %1211 = vst [vmem:[#allocation2 + $0x1d0] sm:$0xff] %v1083
    %1212 = vst [vmem:[#allocation2 + $0x1d8] sm:$0xff] %v1084
    %1213 = vst [vmem:[#allocation2 + $0x1e0] sm:$0xff] %v1085
    %1214 = vst [vmem:[#allocation2 + $0x1e8] sm:$0xff] %v1086
    %1215 = vst [vmem:[#allocation2 + $0x1f0] sm:$0xff] %v1087
    %1216 = vst [vmem:[#allocation2 + $0x1f8] sm:$0xff] %v1088
    // Predicated region
    $region14: #{tpu_custom_call.1} parent=1 // pred_check
      _
    $region15: #{tpu_custom_call.1} parent=1 // pred_check_branch
      %1218 = sbr.rel (0) target = $region17
    $region16: #{tpu_custom_call.1} parent=1 // pred_region
      %s1220 = ssub.s32 8192, 8192
      %1221 = vsyncadd [#allocation3], %s1220
      %s1222 = sshll.u32 [#allocation2], 4
      %s1223 = int_to_ptr.vmem [resolvable:$true] %s1222
      %1228 = dma.vmem_to_hbm [thread:$0]  %s1223, 8192, %s3, [#allocation3], 128, 128, 8
    $region17: #{tpu_custom_call.1} parent=1 // pred_fallthru
      _
    // Predicated region
    $region18: #{tpu_custom_call.1} parent=1 // pred_check
      _
    $region19: #{tpu_custom_call.1} parent=1 // pred_check_branch
      %1230 = sbr.rel (0) target = $region21
    $region20: #{tpu_custom_call.1} parent=1 // pred_region
      %1231 = dma.done [#allocation3], 8192
    $region21: #{tpu_custom_call.1} parent=1 // pred_fallthru
      _
    %1232 = vsyncpa [#allocation3], 1

</llo_original>
